<compile_context>
chip_gen: v5e
topology: v5e:2x2
jax: 0.10.0
libtpu: 0.0.40
codegen_flags: <defaults>
</compile_context>

<pallas_src>
import functools

import jax
import jax.numpy as jnp
from jax import lax
from jax.experimental import pallas as pl
from jax.experimental.pallas import tpu as pltpu

BN_EPS = 1e-5


def _round_up(x, m):
    return (x + m - 1) // m * m


# ---------------------------------------------------------------------------
# Tiling plan (shared by weight prep and forward so padded shapes agree)
# ---------------------------------------------------------------------------
_K_TILE_CANDIDATES = (1024, 896, 768, 640, 512, 384, 256, 128)
_N_TILE_CANDIDATES = (1024, 768, 512, 256, 128)


def _feature_plan(in_f, out_f):
    """Pick K / N tile sizes and padded feature dims.

    Prefers 'no padding' (full-dim blocks or exactly-dividing lane-dense tiles)
    over forced 256-alignment, since padding W/x costs an extra HBM pass.
    """
    # ---- K (reduction) axis ----
    if in_f <= 1024:
        tk, in_p = in_f, in_f                         # single full-dim K tile
    else:
        tk = None
        if in_f % 128 == 0:
            for cand in _K_TILE_CANDIDATES:
                if in_f % cand == 0:
                    tk, in_p = cand, in_f
                    break
        if tk is None:                                # odd large K: pad to 512
            tk = 512
            in_p = _round_up(in_f, tk)
    # ---- N (output-feature) axis ----
    if out_f <= 1024:
        tn, out_p = out_f, out_f                      # single full-dim N tile
    else:
        tn = None
        if out_f % 128 == 0:
            for cand in _N_TILE_CANDIDATES:
                if out_f % cand == 0:
                    tn, out_p = cand, out_f
                    break
        if tn is None:
            out_p = _round_up(out_f, 256)
            tn = 1024 if out_p % 1024 == 0 else (512 if out_p % 512 == 0 else 256)
    return tk, in_p, tn, out_p


def _row_plan(n):
    if n <= 512:
        return n, n                                   # full-dim row block
    for tm in (512, 256, 128):
        if n % tm == 0:
            return tm, n
    return 512, _round_up(n, 512)


# ---------------------------------------------------------------------------
# Kernels
# ---------------------------------------------------------------------------
def _fc_block_kernel_single_k(x_ref, w_ref, ss_ref, o_ref, *, apply_activation):
    # Single K tile: one native (tm,tk)x(tk,tn) MXU matmul + fused FMA epilogue.
    acc = jnp.dot(x_ref[...], w_ref[...], preferred_element_type=jnp.float32)
    y = acc * ss_ref[0:1, :] + ss_ref[1:2, :]
    if apply_activation:
        y = jnp.maximum(y, 0.0)
    o_ref[...] = y.astype(o_ref.dtype)


def _fc_block_kernel_multi_k_inplace(x_ref, w_ref, ss_ref, o_ref, *,
                                     apply_activation):
    # f32 output: accumulate directly into the resident output block (no scratch).
    k = pl.program_id(2)

    @pl.when(k == 0)
    def _():
        o_ref[...] = jnp.zeros_like(o_ref)

    o_ref[...] += jnp.dot(x_ref[...], w_ref[...],
                          preferred_element_type=jnp.float32)

    @pl.when(k == pl.num_programs(2) - 1)
    def _():
        y = o_ref[...] * ss_ref[0:1, :] + ss_ref[1:2, :]
        if apply_activation:
            y = jnp.maximum(y, 0.0)
        o_ref[...] = y


def _fc_block_kernel_multi_k_scratch(x_ref, w_ref, ss_ref, o_ref, acc_ref, *,
                                     apply_activation):
    # Narrow output dtype: keep an f32 accumulator scratch.
    @pl.when(pl.program_id(2) == 0)
    def _():
        acc_ref[...] = jnp.zeros_like(acc_ref)

    acc_ref[...] += jnp.dot(x_ref[...], w_ref[...],
                            preferred_element_type=jnp.float32)

    @pl.when(pl.program_id(2) == pl.num_programs(2) - 1)
    def _():
        y = acc_ref[...] * ss_ref[0:1, :] + ss_ref[1:2, :]
        if apply_activation:
            y = jnp.maximum(y, 0.0)
        o_ref[...] = y.astype(o_ref.dtype)


# ---------------------------------------------------------------------------
# One-time weight prep (outside the hot path)
# ---------------------------------------------------------------------------
def prepare_fc_block(w, b, gamma=None, beta=None, running_mean=None,
                     running_var=None, *, with_batchnorm=True):
    """Fold bias + eval BatchNorm into (scale, shift), transpose W to (K, N),
    and pad the feature dims once so the per-call path never touches W again."""
    out_f, in_f = w.shape
    if with_batchnorm:
        inv_std = lax.rsqrt(running_var.astype(jnp.float32) + BN_EPS)
        scale = gamma.astype(jnp.float32) * inv_std
        shift = beta.astype(jnp.float32) + (
            b.astype(jnp.float32) - running_mean.astype(jnp.float32)) * scale
    else:
        scale = jnp.ones((out_f,), jnp.float32)
        shift = b.astype(jnp.float32)

    _, in_p, _, out_p = _feature_plan(in_f, out_f)

    wt = jnp.asarray(w).T                              # (K, N) — one-time transpose
    if in_p != in_f or out_p != out_f:
        wt = jnp.pad(wt, ((0, in_p - in_f), (0, out_p - out_f)))

    ss = jnp.stack([scale, shift], axis=0)             # (2, out) scale/shift
    if out_p != out_f:
        ss = jnp.pad(ss, ((0, 0), (0, out_p - out_f)))

    return {"wt": wt, "scale_shift": ss,
            "in_features": in_f, "out_features": out_f}


# ---------------------------------------------------------------------------
# Forward
# ---------------------------------------------------------------------------
def fc_block_forward(x, params, *, apply_activation=True):
    """Eval-mode FCBlock forward: relu(BN(x @ W.T + b)); Dropout == identity."""
    wt = params["wt"]
    ss = params["scale_shift"]
    in_f = params["in_features"]
    out_f = params["out_features"]
    n, in_f_x = x.shape
    assert in_f_x == in_f, "input/in_features mismatch"

    tk, in_p, tn, out_p = _feature_plan(in_f, out_f)
    tm, n_p = _row_plan(n)
    gm, gn, gk = n_p // tm, out_p // tn, in_p // tk

    # v7x has 2 TensorCores: ensure >= 2 'parallel' tiles when the feature axis
    # can be split on a 128-lane boundary.
    if gm * gn == 1 and out_p >= 512 and out_p % 256 == 0:
        tn = out_p // 2
        gn = 2

    # Per-call padding only ever touches x (rows / odd-K), never W.
    if n_p != n or in_p != in_f:
        x_in = jnp.pad(x, ((0, n_p - n), (0, in_p - in_f)))
    else:
        x_in = x

    out_dtype = x.dtype
    use_scratch = (gk > 1) and (out_dtype != jnp.float32)

    # VMEM budget: double-buffered tiles + (8,128)-padded scale/shift block,
    # 2x headroom, floor 32 MiB, cap 48 MiB (safe on v7x's 64 MiB physical).
    xsz = jnp.dtype(x.dtype).itemsize
    wsz = jnp.dtype(wt.dtype).itemsize
    osz = jnp.dtype(out_dtype).itemsize
    ss_block = 8 * _round_up(tn, 128) * 4
    tile_bytes = (2 * tm * tk * xsz + 2 * tk * tn * wsz
                  + 2 * tm * tn * osz + 2 * ss_block)
    if use_scratch:
        tile_bytes += tm * tn * 4
    vmem_limit = int(min(48 * 1024 * 1024, max(32 * 1024 * 1024, 2 * tile_bytes)))

    if gk == 1:
        kernel = functools.partial(_fc_block_kernel_single_k,
                                   apply_activation=apply_activation)
        grid = (gm, gn)
        in_specs = [
            pl.BlockSpec((tm, tk), lambda i, j: (i, 0)),   # x       (M, K)
            pl.BlockSpec((tk, tn), lambda i, j: (0, j)),   # W^T     (K, N)
            pl.BlockSpec((2, tn), lambda i, j: (0, j)),    # scale/shift
        ]
        out_spec = pl.BlockSpec((tm, tn), lambda i, j: (i, j))
        scratch = []
        dims = ("parallel", "parallel")
    else:
        if use_scratch:
            kernel = functools.partial(_fc_block_kernel_multi_k_scratch,
                                       apply_activation=apply_activation)
            scratch = [pltpu.VMEM((tm, tn), jnp.float32)]
        else:
            kernel = functools.partial(_fc_block_kernel_multi_k_inplace,
                                       apply_activation=apply_activation)
            scratch = []
        grid = (gm, gn, gk)
        in_specs = [
            pl.BlockSpec((tm, tk), lambda i, j, k: (i, k)),   # x
            pl.BlockSpec((tk, tn), lambda i, j, k: (k, j)),   # W^T
            pl.BlockSpec((2, tn), lambda i, j, k: (0, j)),    # scale/shift
        ]
        out_spec = pl.BlockSpec((tm, tn), lambda i, j, k: (i, j))
        dims = ("parallel", "parallel", "arbitrary")

    out_padded = pl.pallas_call(
        kernel,
        out_shape=jax.ShapeDtypeStruct((n_p, out_p), out_dtype),
        grid_spec=pltpu.PrefetchScalarGridSpec(
            num_scalar_prefetch=0,
            grid=grid,
            in_specs=in_specs,
            out_specs=out_spec,
            scratch_shapes=scratch),
        compiler_params=pltpu.CompilerParams(
            dimension_semantics=dims,
            vmem_limit_bytes=vmem_limit),
    )(x_in, wt, ss)

    if n_p != n or out_p != out_f:
        out_padded = out_padded[:n, :out_f]
    return out_padded


# ---------------------------------------------------------------------------
# Reference (pure JAX, eval mode) + input builder
# ---------------------------------------------------------------------------
def reference_forward(x, w, b, gamma, beta, running_mean, running_var, *,
                      apply_activation=True, with_batchnorm=True):
    y = x @ w.T + b
    if with_batchnorm:
        y = (y - running_mean) / jnp.sqrt(running_var + BN_EPS) * gamma + beta
    if apply_activation:
        y = jnp.maximum(y, 0.0)
    return y


def _make_inputs(key, n, in_f, out_f):
    kx, kw, kb, km, kv, kg, kbe = jax.random.split(key, 7)
    x = jax.random.normal(kx, (n, in_f), dtype=jnp.float32)
    bound = 1.0 / (in_f ** 0.5)
    w = jax.random.uniform(kw, (out_f, in_f), minval=-bound, maxval=bound,
                           dtype=jnp.float32)
    b = jax.random.uniform(kb, (out_f,), minval=-bound, maxval=bound,
                           dtype=jnp.float32)
    gamma = 1.0 + 0.1 * jax.random.normal(kg, (out_f,), dtype=jnp.float32)
    beta = 0.1 * jax.random.normal(kbe, (out_f,), dtype=jnp.float32)
    running_mean = 0.05 * jax.random.normal(km, (out_f,), dtype=jnp.float32)
    running_var = 1.0 + 0.1 * jax.random.uniform(kv, (out_f,), dtype=jnp.float32)
    return x, w, b, gamma, beta, running_mean, running_var


if __name__ == "__main__":
    key = jax.random.PRNGKey(0)
    k1, k2 = jax.random.split(key)

    # --- small shape consistent with the module: batch=8, in=32, out=64 ------
    # (full-dim blocks, no padding, single-K 2-D grid path)
    x, w, b, g, be, rm, rv = _make_inputs(k1, n=8, in_f=32, out_f=64)
    params = prepare_fc_block(w, b, g, be, rm, rv, with_batchnorm=True)
    out = jax.block_until_ready(fc_block_forward(x, params, apply_activation=True))
    ref = reference_forward(x, w, b, g, be, rm, rv, apply_activation=True)
    assert out.shape == ref.shape
    assert jnp.allclose(out, ref, atol=1e-5, rtol=1e-5), "mismatch (2-D grid path)"

    # --- larger K to exercise the tiled K-reduction (accumulate-into-output) --
    x2, w2, b2, g2, be2, rm2, rv2 = _make_inputs(k2, n=64, in_f=2048, out_f=256)
    params2 = prepare_fc_block(w2, b2, g2, be2, rm2, rv2, with_batchnorm=True)
    out2 = jax.block_until_ready(
        fc_block_forward(x2, params2, apply_activation=True))
    ref2 = reference_forward(x2, w2, b2, g2, be2, rm2, rv2, apply_activation=True)
    assert out2.shape == ref2.shape
    assert jnp.allclose(out2, ref2, atol=1e-4, rtol=1e-4), "mismatch (3-D grid path)"

    print("KERNEL_OK")
</pallas_src>

<mosaic_0001>
module attributes {stable_mosaic.version = 11 : i64} {
  func.func @_fc_block_kernel_single_k(%arg0: i32, %arg1: i32, %arg2: memref<8x32xf32, #tpu.memory_space<vmem>>, %arg3: memref<32x64xf32, #tpu.memory_space<vmem>>, %arg4: memref<2x64xf32, #tpu.memory_space<vmem>>, %arg5: memref<8x64xf32, #tpu.memory_space<vmem>>) attributes {dimension_semantics = [#tpu.dimension_semantics<parallel>, #tpu.dimension_semantics<parallel>], iteration_bounds = array<i64: 1, 1>, scalar_prefetch = 0 : i64, scratch_operands = 0 : i64, tpu.core_type = #tpu.core_type<tc>, window_params = [{transform_indices = @transform_0, window_bounds = array<i64: 8, 32>}, {transform_indices = @transform_1, window_bounds = array<i64: 32, 64>}, {transform_indices = @transform_2, window_bounds = array<i64: 2, 64>}, {transform_indices = @transform_3, window_bounds = array<i64: 8, 64>}]} {
    %c0 = arith.constant 0 : index
    %c0_0 = arith.constant 0 : index
    %0 = vector.load %arg2[%c0, %c0_0] : memref<8x32xf32, #tpu.memory_space<vmem>>, vector<8x32xf32>
    %c0_1 = arith.constant 0 : index
    %c0_2 = arith.constant 0 : index
    %1 = vector.load %arg3[%c0_1, %c0_2] : memref<32x64xf32, #tpu.memory_space<vmem>>, vector<32x64xf32>
    %cst = arith.constant dense<0.000000e+00> : vector<8x64xf32>
    %2 = tpu.matmul %0, %1, %cst {dimension_numbers = #tpu.dot_dimension_numbers<[1], [0], [0], [1], [0, 0, 1, 1], [], []>} : vector<8x32xf32>, vector<32x64xf32>, vector<8x64xf32> -> vector<8x64xf32>
    %c0_3 = arith.constant 0 : index
    %c0_4 = arith.constant 0 : index
    %3 = vector.load %arg4[%c0_3, %c0_4] : memref<2x64xf32, #tpu.memory_space<vmem>>, vector<1x64xf32>
    %4 = vector.broadcast %3 : vector<1x64xf32> to vector<8x64xf32>
    %5 = arith.mulf %2, %4 : vector<8x64xf32>
    %c1 = arith.constant 1 : index
    %c0_5 = arith.constant 0 : index
    %6 = vector.load %arg4[%c1, %c0_5] : memref<2x64xf32, #tpu.memory_space<vmem>>, vector<1x64xf32>
    %7 = vector.broadcast %6 : vector<1x64xf32> to vector<8x64xf32>
    %8 = arith.addf %5, %7 : vector<8x64xf32>
    %cst_6 = arith.constant 0.000000e+00 : f32
    %9 = vector.broadcast %cst_6 : f32 to vector<8x64xf32>
    %10 = arith.maximumf %8, %9 : vector<8x64xf32>
    %c0_7 = arith.constant 0 : index
    %c0_8 = arith.constant 0 : index
    %11 = vector.load %arg5[%c0_7, %c0_8] : memref<8x64xf32, #tpu.memory_space<vmem>>, vector<8x64xf32>
    tpu.vector_store %arg5[%c0_7, %c0_8], %10 {strides = array<i32>} : memref<8x64xf32, #tpu.memory_space<vmem>>, vector<8x64xf32>,
    return
  }
  func.func @transform_0(%arg0: i32, %arg1: i32) -> (i32, i32) {
    %c0_i32 = arith.constant 0 : i32
    %c0_i32_0 = arith.constant 0 : i32
    return %arg0, %c0_i32 : i32, i32
  }
  func.func @transform_1(%arg0: i32, %arg1: i32) -> (i32, i32) {
    %c0_i32 = arith.constant 0 : i32
    %c0_i32_0 = arith.constant 0 : i32
    return %c0_i32, %arg1 : i32, i32
  }
  func.func @transform_2(%arg0: i32, %arg1: i32) -> (i32, i32) {
    %c0_i32 = arith.constant 0 : i32
    %c0_i32_0 = arith.constant 0 : i32
    return %c0_i32, %arg1 : i32, i32
  }
  func.func @transform_3(%arg0: i32, %arg1: i32) -> (i32, i32) {
    %c0_i32 = arith.constant 0 : i32
    return %arg0, %arg1 : i32, i32
  }
}

</mosaic_0001>

<llo_original>
// kernel: tpu_custom_call.1
$region0: #{tpu_custom_call.1}
  #allocation0 [shape = 'u32[]', space=smem, size = 0x4, offset = 0x4, fixed_abs, tag = 'smem constant byte address 0x4 - core index']
  #allocation1 [shape = 'u32[72,128]{1,0:T(1,128)}', space=vmem, size = 0x9000, scoped, tag = 'internal scratch']
  %s0 = inlined_call_operand.hbm [shape: f32[8,32], index: 0, kind: input, shape index: {}]
  %s1 = inlined_call_operand.hbm [shape: f32[32,64], index: 1, kind: input, shape index: {}]
  %s2 = inlined_call_operand.hbm [shape: f32[2,64], index: 2, kind: input, shape index: {}]
  %s3 = inlined_call_operand.hbm [shape: f32[8,64], index: 3, kind: output, shape index: {}]
  %s4 = sld [smem:[#allocation0]]
  $region34: #{tpu_custom_call.1} parent=0
    _
  %s6 = ssub.s32 1, %s4
  %s7 = scalar_select 0, %s6, %s4
  $region1: #{tpu_custom_call.1} parent=0
    #allocation2 [shape = 'u8[4096]{0}', space=vmem, size = 0x1000, scoped, tag = 'input window, operand 0, single buffered']
    #allocation3 [shape = 's32[1]{0}', space=sflag, size = 0x4, scoped, tag = 'scoped memory for tpu_custom_call.1']
    #allocation4 [shape = 's32[1]{0}', space=sflag, size = 0x4, scoped, tag = 'scoped memory for tpu_custom_call.1']
    #allocation5 [shape = 'u8[16384]{0}', space=vmem, size = 0x4000, scoped, tag = 'input window, operand 1, single buffered']
    #allocation6 [shape = 's32[1]{0}', space=sflag, size = 0x4, scoped, tag = 'scoped memory for tpu_custom_call.1']
    #allocation7 [shape = 'u8[1024]{0}', space=vmem, size = 0x400, scoped, tag = 'input window, operand 2, single buffered']
    #allocation8 [shape = 'u8[4096]{0}', space=vmem, size = 0x1000, scoped, tag = 'output window, operand 0, single buffered']
    %8 = vsyncpa [#allocation3], 0
    %9 = vsyncpa [#allocation6], 0
    %10 = vsyncpa [#allocation4], 0
    // Predicated region
    $region2: #{tpu_custom_call.1} parent=1 // pred_check
      _
    $region3: #{tpu_custom_call.1} parent=1 // pred_check_branch
      %12 = sbr.rel (0) target = $region5
    $region4: #{tpu_custom_call.1} parent=1 // pred_region
      %14 = vsyncadd [#allocation3], 0
      %s16 = sshll.u32 %s0, 4
      %s17 = int_to_ptr.hbm [resolvable:$true] %s16
      %s18 = sshll.u32 [#allocation2], 4
      %s19 = int_to_ptr.vmem [resolvable:$true] %s18
      %21 = dma.hbm_to_vmem [thread:$0]  %s17, 128, %s19, [#allocation3]
    $region5: #{tpu_custom_call.1} parent=1 // pred_fallthru
      _
    // Predicated region
    $region6: #{tpu_custom_call.1} parent=1 // pred_check
      _
    $region7: #{tpu_custom_call.1} parent=1 // pred_check_branch
      %23 = sbr.rel (0) target = $region9
    $region8: #{tpu_custom_call.1} parent=1 // pred_region
      %25 = vsyncadd [#allocation6], 0
      %s26 = sshll.u32 %s1, 4
      %s27 = int_to_ptr.hbm [resolvable:$true] %s26
      %s28 = sshll.u32 [#allocation5], 4
      %s29 = int_to_ptr.vmem [resolvable:$true] %s28
      %34 = dma.hbm_to_vmem [thread:$0]  %s27, 512, %s29, [#allocation6], 128, 128, 8
    $region9: #{tpu_custom_call.1} parent=1 // pred_fallthru
      _
    // Predicated region
    $region10: #{tpu_custom_call.1} parent=1 // pred_check
      _
    $region11: #{tpu_custom_call.1} parent=1 // pred_check_branch
      %36 = sbr.rel (0) target = $region13
    $region12: #{tpu_custom_call.1} parent=1 // pred_region
      %38 = vsyncadd [#allocation6], 0
      %s40 = sshll.u32 %s2, 4
      %s41 = int_to_ptr.hbm [resolvable:$true] %s40
      %s42 = sshll.u32 [#allocation7], 4
      %s43 = int_to_ptr.vmem [resolvable:$true] %s42
      %45 = dma.hbm_to_vmem [thread:$0]  %s41, 32, %s43, [#allocation6]
    $region13: #{tpu_custom_call.1} parent=1 // pred_fallthru
      _
    // Predicated region
    $region14: #{tpu_custom_call.1} parent=1 // pred_check
      _
    $region15: #{tpu_custom_call.1} parent=1 // pred_check_branch
      %47 = sbr.rel (0) target = $region17
    $region16: #{tpu_custom_call.1} parent=1 // pred_region
      %49 = dma.done [#allocation3], 128
    $region17: #{tpu_custom_call.1} parent=1 // pred_fallthru
      _
    // Predicated region
    $region18: #{tpu_custom_call.1} parent=1 // pred_check
      _
    $region19: #{tpu_custom_call.1} parent=1 // pred_check_branch
      %51 = sbr.rel (0) target = $region21
    $region20: #{tpu_custom_call.1} parent=1 // pred_region
      %53 = dma.done [#allocation6], 512
    $region21: #{tpu_custom_call.1} parent=1 // pred_fallthru
      _
    // Predicated region
    $region22: #{tpu_custom_call.1} parent=1 // pred_check
      _
    $region23: #{tpu_custom_call.1} parent=1 // pred_check_branch
      %55 = sbr.rel (0) target = $region25
    $region24: #{tpu_custom_call.1} parent=1 // pred_region
      %57 = dma.done [#allocation6], 32
    $region25: #{tpu_custom_call.1} parent=1 // pred_fallthru
      _
    %v58 = vld [vmem:[#allocation2] sm:$0xff]
    %v59 = vld [vmem:[#allocation5] sm:$0xff]
    %v60 = vld [vmem:[#allocation5 + $0x8] sm:$0xff]
    %v61 = vld [vmem:[#allocation5 + $0x10] sm:$0xff]
    %v62 = vld [vmem:[#allocation5 + $0x18] sm:$0xff]
    %vm63 = vcmask 261120
    %v65 = vsel %vm63, %v58, 0
    %67 = vmatpush.msra.mxu0 0.0
    %68 = vmatpush.msra.mxu0 0.0
    %69 = vmatpush.msra.mxu0 0.0
    %70 = vmatpush.msra.mxu0 0.0
    %71 = vmatpush.msra.mxu0 0.0
    %72 = vmatpush.msra.mxu0 0.0
    %73 = vmatpush.msra.mxu0 0.0
    %74 = vmatpush.msra.mxu0 0.0
    %75 = vmatpush.msra.mxu0 0.0
    %76 = vmatpush.msra.mxu0 0.0
    %77 = vmatpush.msra.mxu0 0.0
    %78 = vmatpush.msra.mxu0 0.0
    %79 = vmatpush.msra.mxu0 %v62
    %80 = vmatpush.msra.mxu0 %v61
    %81 = vmatpush.msra.mxu0 %v60
    %82 = vmatpush.msra.mxu0 %v59
    %83 = vmatmul.f32.gmra.mxu0 %v65
    %v84 = vpop.f32.mrf.mxu0
    %v85 = vadd.f32 0.0, %v84
    %86 = vdwg.mxu0
    %v87 = vld [vmem:[#allocation7] sm:$0x1]
    %v88 = vperm.slane %v87, 0
    %v89 = vmul.f32 %v85, %v88
    %v90 = vld [vmem:[#allocation7 + $0x1] sm:$0x1]
    %v91 = vperm.slane %v90, 0
    %v92 = vadd.f32 %v89, %v91
    %v93 = vmax.f32 %v92, 0.0
    %vm94 = vcmask 523264
    %95 = vst.msk [vmem:[#allocation8] sm:$0xff] %vm94, %v93
    // Predicated region
    $region26: #{tpu_custom_call.1} parent=1 // pred_check
      _
    $region27: #{tpu_custom_call.1} parent=1 // pred_check_branch
      %97 = sbr.rel (0) target = $region29
    $region28: #{tpu_custom_call.1} parent=1 // pred_region
      %99 = vsyncadd [#allocation4], 0
      %s101 = sshll.u32 [#allocation8], 4
      %s102 = int_to_ptr.vmem [resolvable:$true] %s101
      %s103 = sshll.u32 %s3, 4
      %s104 = int_to_ptr.hbm [resolvable:$true] %s103
      %106 = dma.vmem_to_hbm [thread:$0]  %s102, 128, %s104, [#allocation4]
    $region29: #{tpu_custom_call.1} parent=1 // pred_fallthru
      _
    // Predicated region
    $region30: #{tpu_custom_call.1} parent=1 // pred_check
      _
    $region31: #{tpu_custom_call.1} parent=1 // pred_check_branch
      %108 = sbr.rel (0) target = $region33
    $region32: #{tpu_custom_call.1} parent=1 // pred_region
      %110 = dma.done [#allocation4], 128
    $region33: #{tpu_custom_call.1} parent=1 // pred_fallthru
      _
    %111 = vsyncpa [#allocation3], 1
    %112 = vsyncpa [#allocation6], 1
    %113 = vsyncpa [#allocation4], 1

</llo_original>
